<compile_context>
chip_gen: v7x
topology: tpu7x:2x2x1
jax: 0.10.0
libtpu: 0.0.40
codegen_flags: <defaults>
</compile_context>

<pallas_src>
import functools

import jax
import jax.numpy as jnp
from jax import lax
from jax.experimental import pallas as pl
from jax.experimental.pallas import tpu as pltpu

LANE = 128
MAX_TILE_ROWS = 4096          # 4096 * 128 * 4 B = 2 MiB per f32 input block
NUM_CORE_SPLITS = 2           # v7x has 2 TensorCores; harmless on v5e/v6e


def _bce_terms(p, t):
    """PyTorch BCELoss elementwise term (log clamped at -100)."""
    log_p = jnp.maximum(jnp.log(p), -100.0)
    log_1mp = jnp.maximum(jnp.log(1.0 - p), -100.0)
    # == -(t*log_p + (1-t)*log_1mp), one fewer mul/sub per element.
    return -(log_1mp + t * (log_p - log_1mp))


def _bce_sum_kernel(p_ref, t_ref, o_ref, *, rows, tile_rows,
                    blocks_per_core, needs_mask):
    c = pl.program_id(0)   # core-split index
    i = pl.program_id(1)   # row-block index within this core's share

    @pl.when(i == 0)
    def _():
        o_ref[...] = jnp.zeros_like(o_ref)

    p = p_ref[...].astype(jnp.float32)
    t = t_ref[...].astype(jnp.float32)

    if needs_mask:
        # Global (logical) row-block index; fully-OOB blocks were clamped in
        # the index_map (they re-read valid data) and are zeroed out here.
        rb = c * blocks_per_core + i
        row_base = rb * tile_rows
        local_row = lax.broadcasted_iota(jnp.int32, (tile_rows, LANE), 0)
        valid = (row_base + local_row) < rows
        # pred=1, target=1 -> loss contribution exactly 0 (and finite logs),
        # so garbage in DMA-padded / out-of-range rows never reaches the mean.
        p = jnp.where(valid, p, 1.0)
        t = jnp.where(valid, t, 1.0)

    loss = _bce_terms(p, t)

    # Vector accumulator: per-lane partial sums, reduced once in the wrapper.
    o_ref[...] += jnp.sum(loss, axis=0, keepdims=True)


def seg_loss(pred, target):
    """BCELoss(pred, target) with mean reduction, computed in a Pallas kernel."""
    assert pred.shape == target.shape
    total_n = pred.size

    flat_p = pred.reshape(-1)
    flat_t = target.reshape(-1)

    rem = total_n % LANE
    main_n = total_n - rem

    # Sub-lane-width tail (< 128 elements): plain JAX, negligible.
    if rem:
        tail_sum = jnp.sum(
            _bce_terms(flat_p[main_n:].astype(jnp.float32),
                       flat_t[main_n:].astype(jnp.float32)))
    else:
        tail_sum = jnp.float32(0.0)

    if main_n == 0:
        return tail_sum / jnp.float32(total_n)

    rows = main_n // LANE
    if rem:
        p2d = flat_p[:main_n].reshape(rows, LANE)
        t2d = flat_t[:main_n].reshape(rows, LANE)
    else:
        p2d = flat_p.reshape(rows, LANE)
        t2d = flat_t.reshape(rows, LANE)

    # Block shape: full extent when small (always legal), else 4096 rows (2 MiB).
    tile_rows = rows if rows <= MAX_TILE_ROWS else MAX_TILE_ROWS
    n_blocks = pl.cdiv(rows, tile_rows)
    blocks_per_core = pl.cdiv(n_blocks, NUM_CORE_SPLITS)
    # Mask needed if any logical block extends past the valid rows.
    needs_mask = NUM_CORE_SPLITS * blocks_per_core * tile_rows != rows

    kernel = functools.partial(
        _bce_sum_kernel,
        rows=rows,
        tile_rows=tile_rows,
        blocks_per_core=blocks_per_core,
        needs_mask=needs_mask,
    )

    def in_map(c, i):
        # Clamp fully-out-of-range logical blocks onto the last real block;
        # the in-kernel mask zeroes their contribution.
        return (jnp.minimum(c * blocks_per_core + i, n_blocks - 1), 0)

    itemsize = jnp.dtype(pred.dtype).itemsize
    cost = pl.CostEstimate(
        flops=12 * main_n,
        transcendentals=2 * main_n,
        bytes_accessed=2 * main_n * itemsize + NUM_CORE_SPLITS * LANE * 4,
    )

    partials = pl.pallas_call(
        kernel,
        out_shape=jax.ShapeDtypeStruct((NUM_CORE_SPLITS, 1, LANE), jnp.float32),
        grid_spec=pltpu.PrefetchScalarGridSpec(
            num_scalar_prefetch=0,
            grid=(NUM_CORE_SPLITS, blocks_per_core),
            in_specs=[
                pl.BlockSpec((tile_rows, LANE), in_map),
                pl.BlockSpec((tile_rows, LANE), in_map),
            ],
            out_specs=pl.BlockSpec((None, 1, LANE), lambda c, i: (c, 0, 0)),
        ),
        compiler_params=pltpu.CompilerParams(
            dimension_semantics=("parallel", "arbitrary"),
        ),
        cost_estimate=cost,
    )(p2d, t2d)

    return (jnp.sum(partials) + tail_sum) / jnp.float32(total_n)


if __name__ == "__main__":
    key = jax.random.PRNGKey(0)
    k1, k2 = jax.random.split(key)

    B, C, H, W = 2, 4, 16, 16  # NCHW, matching the PyTorch convention
    # pred must be probabilities in (0, 1); target in [0, 1].
    pred = jax.nn.sigmoid(jax.random.normal(k1, (B, C, H, W), jnp.float32))
    target = (jax.random.uniform(k2, (B, C, H, W)) > 0.5).astype(jnp.float32)

    loss = jax.jit(seg_loss)(pred, target)
    jax.block_until_ready(loss)

    # Reference check (plain JAX BCE with PyTorch's -100 log clamp).
    ref = jnp.mean(
        -(
            target * jnp.maximum(jnp.log(pred), -100.0)
            + (1.0 - target) * jnp.maximum(jnp.log(1.0 - pred), -100.0)
        )
    )
    assert jnp.allclose(loss, ref, rtol=1e-5, atol=1e-6), (loss, ref)

    print("KERNEL_OK")
</pallas_src>

<mosaic_0001>
module attributes {stable_mosaic.version = 11 : i64} {
  func.func @_bce_sum_kernel(%arg0: i32, %arg1: i32, %arg2: memref<16x128xf32, #tpu.memory_space<vmem>>, %arg3: memref<16x128xf32, #tpu.memory_space<vmem>>, %arg4: memref<1x1x128xf32, #tpu.memory_space<vmem>>) attributes {dimension_semantics = [#tpu.dimension_semantics<parallel>, #tpu.dimension_semantics<arbitrary>], iteration_bounds = array<i64: 2, 1>, scalar_prefetch = 0 : i64, scratch_operands = 0 : i64, tpu.core_type = #tpu.core_type<tc>, window_params = [{transform_indices = @transform_0, window_bounds = array<i64: 16, 128>}, {transform_indices = @transform_1, window_bounds = array<i64: 16, 128>}, {transform_indices = @transform_2, window_bounds = array<i64: 1, 1, 128>}]} {
    %c0_i32 = arith.constant 0 : i32
    %0 = arith.cmpi eq, %arg1, %c0_i32 : i32
    %1 = arith.extui %0 : i1 to i32
    %c0_i32_0 = arith.constant 0 : i32
    %2 = arith.cmpi ne, %1, %c0_i32_0 : i32
    scf.if %2 {
      %cst_17 = arith.constant 0.000000e+00 : f32
      %38 = vector.broadcast %cst_17 : f32 to vector<1x128xf32>
      %c0_18 = arith.constant 0 : index
      %c0_19 = arith.constant 0 : index
      %c0_20 = arith.constant 0 : index
      %39 = vector.load %arg4[%c0_18, %c0_19, %c0_20] : memref<1x1x128xf32, #tpu.memory_space<vmem>>, vector<1x1x128xf32>
      %40 = vector.shape_cast %39 : vector<1x1x128xf32> to vector<1x128xf32>
      %41 = vector.shape_cast %38 : vector<1x128xf32> to vector<1x1x128xf32>
      tpu.vector_store %arg4[%c0_18, %c0_19, %c0_20], %41 {strides = array<i32>} : memref<1x1x128xf32, #tpu.memory_space<vmem>>, vector<1x1x128xf32>,
    } else {
    }
    %c0 = arith.constant 0 : index
    %c0_1 = arith.constant 0 : index
    %3 = vector.load %arg2[%c0, %c0_1] : memref<16x128xf32, #tpu.memory_space<vmem>>, vector<16x128xf32>
    %c0_2 = arith.constant 0 : index
    %c0_3 = arith.constant 0 : index
    %4 = vector.load %arg3[%c0_2, %c0_3] : memref<16x128xf32, #tpu.memory_space<vmem>>, vector<16x128xf32>
    %c1_i32 = arith.constant 1 : i32
    %5 = arith.muli %arg0, %c1_i32 : i32
    %6 = arith.addi %5, %arg1 : i32
    %c16_i32 = arith.constant 16 : i32
    %7 = arith.muli %6, %c16_i32 : i32
    %8 = tpu.iota {dimensions = array<i32: 0>} : vector<16x128xi32>
    %9 = vector.broadcast %7 : i32 to vector<16x128xi32>
    %10 = arith.addi %9, %8 : vector<16x128xi32>
    %c16_i32_4 = arith.constant 16 : i32
    %11 = vector.broadcast %c16_i32_4 : i32 to vector<16x128xi32>
    %12 = arith.cmpi slt, %10, %11 : vector<16x128xi32>
    %cst = arith.constant 1.000000e+00 : f32
    %13 = vector.broadcast %cst : f32 to vector<16x128xf32>
    %14 = arith.select %12, %3, %13 : vector<16x128xi1>, vector<16x128xf32>
    %cst_5 = arith.constant 1.000000e+00 : f32
    %15 = vector.broadcast %cst_5 : f32 to vector<16x128xf32>
    %16 = arith.select %12, %4, %15 : vector<16x128xi1>, vector<16x128xf32>
    %17 = math.log %14 : vector<16x128xf32>
    %cst_6 = arith.constant -1.000000e+02 : f32
    %18 = vector.broadcast %cst_6 : f32 to vector<16x128xf32>
    %19 = arith.maximumf %17, %18 : vector<16x128xf32>
    %cst_7 = arith.constant 1.000000e+00 : f32
    %20 = vector.broadcast %cst_7 : f32 to vector<16x128xf32>
    %21 = arith.subf %20, %14 : vector<16x128xf32>
    %22 = math.log %21 : vector<16x128xf32>
    %cst_8 = arith.constant -1.000000e+02 : f32
    %23 = vector.broadcast %cst_8 : f32 to vector<16x128xf32>
    %24 = arith.maximumf %22, %23 : vector<16x128xf32>
    %25 = arith.subf %19, %24 : vector<16x128xf32>
    %26 = arith.mulf %16, %25 : vector<16x128xf32>
    %27 = arith.addf %24, %26 : vector<16x128xf32>
    %cst_9 = arith.constant 0.000000e+00 : f32
    %28 = vector.broadcast %cst_9 : f32 to vector<16x128xf32>
    %29 = arith.subf %28, %27 : vector<16x128xf32>
    %c0_10 = arith.constant 0 : index
    %c0_11 = arith.constant 0 : index
    %c0_12 = arith.constant 0 : index
    %30 = vector.load %arg4[%c0_10, %c0_11, %c0_12] : memref<1x1x128xf32, #tpu.memory_space<vmem>>, vector<1x1x128xf32>
    %31 = vector.shape_cast %30 : vector<1x1x128xf32> to vector<1x128xf32>
    %cst_13 = arith.constant dense<0.000000e+00> : vector<128xf32>
    %32 = vector.multi_reduction <add>, %29, %cst_13 [0] : vector<16x128xf32> to vector<128xf32>
    %33 = vector.shape_cast %32 : vector<128xf32> to vector<1x128xf32>
    %34 = arith.addf %31, %33 : vector<1x128xf32>
    %c0_14 = arith.constant 0 : index
    %c0_15 = arith.constant 0 : index
    %c0_16 = arith.constant 0 : index
    %35 = vector.load %arg4[%c0_14, %c0_15, %c0_16] : memref<1x1x128xf32, #tpu.memory_space<vmem>>, vector<1x1x128xf32>
    %36 = vector.shape_cast %35 : vector<1x1x128xf32> to vector<1x128xf32>
    %37 = vector.shape_cast %34 : vector<1x128xf32> to vector<1x1x128xf32>
    tpu.vector_store %arg4[%c0_14, %c0_15, %c0_16], %37 {strides = array<i32>} : memref<1x1x128xf32, #tpu.memory_space<vmem>>, vector<1x1x128xf32>,
    return
  }
  func.func @transform_0(%arg0: i32, %arg1: i32) -> (i32, i32) {
    %c1_i32 = arith.constant 1 : i32
    %0 = arith.muli %arg0, %c1_i32 : i32
    %1 = arith.addi %0, %arg1 : i32
    %c0_i32 = arith.constant 0 : i32
    %2 = arith.minsi %1, %c0_i32 : i32
    %c0_i32_0 = arith.constant 0 : i32
    %c0_i32_1 = arith.constant 0 : i32
    return %2, %c0_i32_0 : i32, i32
  }
  func.func @transform_1(%arg0: i32, %arg1: i32) -> (i32, i32) {
    %c1_i32 = arith.constant 1 : i32
    %0 = arith.muli %arg0, %c1_i32 : i32
    %1 = arith.addi %0, %arg1 : i32
    %c0_i32 = arith.constant 0 : i32
    %2 = arith.minsi %1, %c0_i32 : i32
    %c0_i32_0 = arith.constant 0 : i32
    %c0_i32_1 = arith.constant 0 : i32
    return %2, %c0_i32_0 : i32, i32
  }
  func.func @transform_2(%arg0: i32, %arg1: i32) -> (i32, i32, i32) {
    %c0_i32 = arith.constant 0 : i32
    %c0_i32_0 = arith.constant 0 : i32
    %c0_i32_1 = arith.constant 0 : i32
    return %arg0, %c0_i32, %c0_i32_0 : i32, i32, i32
  }
}

</mosaic_0001>

<llo_original>
// kernel: seg_loss.1
$region0: #{seg_loss.1}
  #allocation0 [shape = 'u32[]', space=smem, size = 0x4, offset = 0x4, fixed_abs, tag = 'smem constant byte address 0x4 - core index']
  #allocation1 [shape = 'u32[144,128]{1,0:T(1,128)}', space=vmem, size = 0x12000, scoped, tag = 'internal scratch']
  %s0 = inlined_call_operand.vmem [shape: f32[16,128], index: 0, kind: input, shape index: {}]
  %s1 = inlined_call_operand.vmem [shape: f32[16,128], index: 1, kind: input, shape index: {}]
  %s2 = inlined_call_operand.vmem [shape: f32[2,1,128], index: 2, kind: output, shape index: {}]
  %s3 = sld [smem:[#allocation0]]
  $region45: #{seg_loss.1} parent=0
    _
  %s5 = ssub.s32 1, %s3
  %s6 = scalar_select 0, %s5, %s3
  loop: start=0, step=1, limit=4
  $region2: #{seg_loss.1} parent=0 // loop_pre_header
    _
  $region3: #{seg_loss.1} parent=0 // loop_header
    %s8 = sphi 0, %s12
    %p9 = scmp.ge.s32.totalorder %s8, 4
    %s15 = sphi 0, %s27
    %s16 = sphi 0, %s23
    %s17 = sphi 0, %s15
    %s18 = sphi 0, %s16
    %s19 = sphi 0, %s17
    %s20 = sphi 0, %s18
    %s36 = sphi 0, %s38
    %s39 = sphi 0, %s36
    %s40 = sphi 0, %s39
    %s56 = sphi 0, %s40
    %s68 = sphi 0, %s70
    %s71 = sphi 0, %s68
    %s72 = sphi 0, %s71
    %s88 = sphi 0, %s72
    %s94 = sphi 0, %s96
    %s97 = sphi 0, %s94
    %s98 = sphi 0, %s97
    %s114 = sphi 0, %s98
  $region4: #{seg_loss.1} parent=0 // loop_header_branch
    %11 = sbr.rel (%p9) target = $region8
  $region5: #{seg_loss.1} parent=0 // loop_body
    %s13 = ssub.s32 %s8, 1
    %s14 = ssub.s32 %s8, 2
    %s21 = sadd.s32 1, %s16
    %p22 = scmp.ge.s32.totalorder %s21, 1
    %s23 = scalar_select %p22, 0, %s21
    %s24 = sadd.s32 1, %s15
    %s25 = scalar_select %p22, %s24, %s15
    %p26 = scmp.ge.s32.totalorder %s25, 2
    %s27 = scalar_select %p26, 0, %s25
    %s28 = sadd.s32 %s15, %s16
    %p29 = scmp.lt.s32.totalorder %s28, 0
    %s30 = scalar_select %p29, %s28, 0
    %s31 = sadd.s32 %s27, %s23
    %p32 = scmp.lt.s32.totalorder %s31, 0
    %s33 = scalar_select %p32, %s31, 0
    %s34 = ssub.s32 %s30, %s33
    %p35 = scmp.eq.s32.totalorder %s34, 0
    %s37 = sadd.s32 %s36, 1
    %s38 = scalar_select %p35, %s36, %s37
    %p41 = pneg %p35
    %p42 = scmp.eq.s32.totalorder %s8, 1
    %p43 = por %p41, %p42
    %p44 = scmp.ne.s32.totalorder %s36, %s39
    %p45 = scmp.eq.s32.totalorder %s8, 0
    %p46 = por %p44, %p45
    %p47 = scmp.ne.s32.totalorder %s36, %s39
    %p48 = scmp.eq.s32.totalorder %s13, 1
    %p49 = por %p47, %p48
    %p50 = scmp.ne.s32.totalorder %s39, %s40
    %p51 = scmp.eq.s32.totalorder %s13, 0
    %p52 = por %p50, %p51
    %p53 = scmp.ne.s32.totalorder %s39, %s40
    %p54 = scmp.eq.s32.totalorder %s14, 1
    %p55 = por %p53, %p54
    %p57 = scmp.ne.s32.totalorder %s40, %s56
    %p58 = scmp.eq.s32.totalorder %s14, 0
    %p59 = por %p57, %p58
    %s60 = sadd.s32 %s15, %s16
    %p61 = scmp.lt.s32.totalorder %s60, 0
    %s62 = scalar_select %p61, %s60, 0
    %s63 = sadd.s32 %s27, %s23
    %p64 = scmp.lt.s32.totalorder %s63, 0
    %s65 = scalar_select %p64, %s63, 0
    %s66 = ssub.s32 %s62, %s65
    %p67 = scmp.eq.s32.totalorder %s66, 0
    %s69 = sadd.s32 %s68, 1
    %s70 = scalar_select %p67, %s68, %s69
    %p73 = pneg %p67
    %p74 = scmp.eq.s32.totalorder %s8, 1
    %p75 = por %p73, %p74
    %p76 = scmp.ne.s32.totalorder %s68, %s71
    %p77 = scmp.eq.s32.totalorder %s8, 0
    %p78 = por %p76, %p77
    %p79 = scmp.ne.s32.totalorder %s68, %s71
    %p80 = scmp.eq.s32.totalorder %s13, 1
    %p81 = por %p79, %p80
    %p82 = scmp.ne.s32.totalorder %s71, %s72
    %p83 = scmp.eq.s32.totalorder %s13, 0
    %p84 = por %p82, %p83
    %p85 = scmp.ne.s32.totalorder %s71, %s72
    %p86 = scmp.eq.s32.totalorder %s14, 1
    %p87 = por %p85, %p86
    %p89 = scmp.ne.s32.totalorder %s72, %s88
    %p90 = scmp.eq.s32.totalorder %s14, 0
    %p91 = por %p89, %p90
    %s92 = ssub.s32 %s15, %s27
    %p93 = scmp.eq.s32.totalorder %s92, 0
    %s95 = sadd.s32 %s94, 1
    %s96 = scalar_select %p93, %s94, %s95
    %p99 = pneg %p93
    %p100 = scmp.eq.s32.totalorder %s8, 1
    %p101 = por %p99, %p100
    %p102 = scmp.ne.s32.totalorder %s94, %s97
    %p103 = scmp.eq.s32.totalorder %s8, 0
    %p104 = por %p102, %p103
    %p105 = scmp.ne.s32.totalorder %s94, %s97
    %p106 = scmp.eq.s32.totalorder %s13, 1
    %p107 = por %p105, %p106
    %p108 = scmp.ne.s32.totalorder %s97, %s98
    %p109 = scmp.eq.s32.totalorder %s13, 0
    %p110 = por %p108, %p109
    %p111 = scmp.ne.s32.totalorder %s97, %s98
    %p112 = scmp.eq.s32.totalorder %s14, 1
    %p113 = por %p111, %p112
    %p115 = scmp.ne.s32.totalorder %s98, %s114
    %p116 = scmp.eq.s32.totalorder %s14, 0
    %p117 = por %p115, %p116
    %p118 = scmp.le.s32.totalorder 1, %s8
    %p119 = scmp.lt.s32.totalorder %s8, 3
    %p120 = pnand %p118, %p119
    %p121 = pneg %p120
    // Predicated region
    $region9: #{seg_loss.1} parent=5 // pred_check
      _
    $region10: #{seg_loss.1} parent=5 // pred_check_branch
      %123 = sbr.rel (%p120) target = $region12
    $region11: #{seg_loss.1} parent=5 // pred_region
      %s124 = ssub.s32 %s8, 1
    $region12: #{seg_loss.1} parent=5 // pred_fallthru
      _
    %p125 = scmp.lt.s32.totalorder %s8, 2
    // Predicated region
    $region13: #{seg_loss.1} parent=5 // pred_check
      %p126 = pneg %p125
    $region14: #{seg_loss.1} parent=5 // pred_check_branch
      %128 = sbr.rel (%p126) target = $region16
    $region15: #{seg_loss.1} parent=5 // pred_region
      // Predicated region
      $region17: #{seg_loss.1} parent=15 // pred_check
        %p129 = pneg %p46
      $region18: #{seg_loss.1} parent=15 // pred_check_branch
        %131 = sbr.rel (%p129) target = $region20
      $region19: #{seg_loss.1} parent=15 // pred_region
        %s132 = sadd.s32 %s15, %s16
        %p133 = scmp.lt.s32.totalorder %s132, 0
        %s134 = scalar_select %p133, %s132, 0
        %s135 = smul.u32 2, %s134
        %p136 = scmp.lt.s32.totalorder %s135, 1
        %s137 = scalar_select %p136, %s135, 1
        %s138 = smul.addr %s137, 8
        %s139 = scalar_lea.vmem %s0, %s138
        %s140 = sadd.s32 %s15, %s16
        %p141 = scmp.lt.s32.totalorder %s140, 0
        %s142 = scalar_select %p141, %s140, 0
        %s143 = smul.u32 2, %s142
      $region20: #{seg_loss.1} parent=15 // pred_fallthru
        _
      // Predicated region
      $region21: #{seg_loss.1} parent=15 // pred_check
        %p144 = pneg %p78
      $region22: #{seg_loss.1} parent=15 // pred_check_branch
        %146 = sbr.rel (%p144) target = $region24
      $region23: #{seg_loss.1} parent=15 // pred_region
        %s147 = sadd.s32 %s15, %s16
        %p148 = scmp.lt.s32.totalorder %s147, 0
        %s149 = scalar_select %p148, %s147, 0
        %s150 = smul.u32 2, %s149
        %p151 = scmp.lt.s32.totalorder %s150, 1
        %s152 = scalar_select %p151, %s150, 1
        %s153 = smul.addr %s152, 8
        %s154 = scalar_lea.vmem %s1, %s153
        %s155 = sadd.s32 %s15, %s16
        %p156 = scmp.lt.s32.totalorder %s155, 0
        %s157 = scalar_select %p156, %s155, 0
        %s158 = smul.u32 2, %s157
      $region24: #{seg_loss.1} parent=15 // pred_fallthru
        _
    $region16: #{seg_loss.1} parent=5 // pred_fallthru
      _
    %p159 = scmp.le.s32.totalorder 1, %s8
    %p160 = scmp.lt.s32.totalorder %s8, 3
    %p161 = pnand %p159, %p160
    %p162 = pneg %p161
    // Predicated region
    $region25: #{seg_loss.1} parent=5 // pred_check
      _
    $region26: #{seg_loss.1} parent=5 // pred_check_branch
      %164 = sbr.rel (%p161) target = $region28
    $region27: #{seg_loss.1} parent=5 // pred_region
      %s165 = ssub.s32 %s8, 1
      %s166 = sadd.s32 %s17, %s18
      %p167 = scmp.lt.s32.totalorder %s166, 0
      %s168 = scalar_select %p167, %s166, 0
      %s169 = smul.u32 2, %s168
      %p170 = scmp.lt.s32.totalorder %s169, 1
      %s171 = scalar_select %p170, %s169, 1
      %s172 = smul.addr %s171, 8
      %s173 = scalar_lea.vmem %s0, %s172
      %p174 = pneg %p52
      %p175 = pneg %p49
      %s176 = sadd.s32 %s17, %s18
      %p177 = scmp.lt.s32.totalorder %s176, 0
      %s178 = scalar_select %p177, %s176, 0
      %s179 = smul.u32 2, %s178
      %p180 = scmp.lt.s32.totalorder %s179, 1
      %s181 = scalar_select %p180, %s179, 1
      %s182 = smul.addr %s181, 8
      %s183 = scalar_lea.vmem %s1, %s182
      %p184 = pneg %p84
      %p185 = pneg %p81
      %p186 = pneg %p110
      %p187 = pneg %p107
      %p188 = scmp.lt.s32.totalorder %s17, 1
      %s189 = scalar_select %p188, %s17, 1
      %s190 = scalar_lea.vmem %s2, %s189
      %s191 = sadd.s32 %s17, %s18
      %p192 = scmp.lt.s32.totalorder %s191, 0
      %s193 = scalar_select %p192, %s191, 0
      %s194 = smul.u32 2, %s193
      %p195 = scmp.lt.s32.totalorder %s194, 1
      %s196 = scalar_select %p195, %s194, 1
      %s197 = smul.addr %s196, 8
      %s198 = scalar_lea.vmem %s0, %s197
      %s199 = sadd.s32 %s17, %s18
      %p200 = scmp.lt.s32.totalorder %s199, 0
      %s201 = scalar_select %p200, %s199, 0
      %s202 = smul.u32 2, %s201
      %s203 = sadd.s32 %s17, %s18
      %p204 = scmp.lt.s32.totalorder %s203, 0
      %s205 = scalar_select %p204, %s203, 0
      %s206 = smul.u32 2, %s205
      %p207 = scmp.lt.s32.totalorder %s206, 1
      %s208 = scalar_select %p207, %s206, 1
      %s209 = smul.addr %s208, 8
      %s210 = scalar_lea.vmem %s1, %s209
      %s211 = sadd.s32 %s17, %s18
      %p212 = scmp.lt.s32.totalorder %s211, 0
      %s213 = scalar_select %p212, %s211, 0
      %s214 = smul.u32 2, %s213
      %p215 = scmp.lt.s32.totalorder %s17, 1
      %s216 = scalar_select %p215, %s17, 1
      %s217 = scalar_lea.vmem %s2, %s216
      %p218 = scmp.eq.s32.totalorder %s18, 0
      // Predicated region
      $region29: #{seg_loss.1} parent=27 // pred_check
        %p219 = pneg %p218
      $region30: #{seg_loss.1} parent=27 // pred_check_branch
        %221 = sbr.rel (%p219) target = $region32
      $region31: #{seg_loss.1} parent=27 // pred_region
        %222 = vst [vmem:[%s217] sm:$0x1] 0.0
      $region32: #{seg_loss.1} parent=27 // pred_fallthru
        _
      %v223 = vld [vmem:[%s198] sm:$0xff]
      %v224 = vld [vmem:[%s198 + $0x8] sm:$0xff]
      %v225 = vld [vmem:[%s210] sm:$0xff]
      %v226 = vld [vmem:[%s210 + $0x8] sm:$0xff]
      %s227 = sadd.s32 %s17, %s18
      %s228 = smul.u32 %s227, 16
      %v229 = vlaneseq
      %v230 = vshrl.u32 %v229, 7
      %v231 = vadd.s32 %v230, 8
      %v232 = vstv %s228
      %v233 = vadd.s32 %v232, %v230
      %v234 = vadd.s32 %v232, %v231
      %vm235 = vcmp.lt.s32.totalorder %v233, 16
      %vm236 = vcmp.lt.s32.totalorder %v234, 16
      %v237 = vsel %vm235, %v223, 1.0
      %v238 = vsel %vm236, %v224, 1.0
      %v239 = vsel %vm235, %v225, 1.0
      %v240 = vsel %vm236, %v226, 1.0
      %v241 = vlog2.pop %v237
      %v242 = vmul.f32 %v241, 0.6931472
      %v243 = vlog2.pop %v238
      %v244 = vmul.f32 %v243, 0.6931472
      %v245 = vmax.f32 %v242, -100.0
      %v246 = vmax.f32 %v244, -100.0
      %v247 = vsub.f32 1.0, %v237
      %v248 = vsub.f32 1.0, %v238
      %v249 = vlog2.pop %v247
      %v250 = vmul.f32 %v249, 0.6931472
      %v251 = vlog2.pop %v248
      %v252 = vmul.f32 %v251, 0.6931472
      %v253 = vmax.f32 %v250, -100.0
      %v254 = vmax.f32 %v252, -100.0
      %v255 = vsub.f32 %v245, %v253
      %v256 = vsub.f32 %v246, %v254
      %v257 = vmul.f32 %v239, %v255
      %v258 = vmul.f32 %v240, %v256
      %v259 = vadd.f32 %v253, %v257
      %v260 = vadd.f32 %v254, %v258
      %v261 = vsub.f32 0.0, %v259
      %v262 = vsub.f32 0.0, %v260
      %v263 = vld [vmem:[%s217] sm:$0x1]
      %v264 = vadd.f32 %v261, %v262
      %v265 = vrot.slane %v264, 4
      %v266 = vadd.f32 %v264, %v265
      %v267 = vrot.slane %v266, 2
      %v268 = vadd.f32 %v266, %v267
      %v269 = vrot.slane %v268, 1
      %v270 = vadd.f32 %v268, %v269
      %v271 = vadd.f32 %v263, %v270
      %272 = vst [vmem:[%s217] sm:$0x1] %v271
      %p273 = scmp.lt.s32.totalorder %s17, 1
      %s274 = scalar_select %p273, %s17, 1
      %s275 = scalar_lea.vmem %s2, %s274
      // Predicated region
      $region33: #{seg_loss.1} parent=27 // pred_check
        %p276 = pneg %p107
      $region34: #{seg_loss.1} parent=27 // pred_check_branch
        %278 = sbr.rel (%p276) target = $region36
      $region35: #{seg_loss.1} parent=27 // pred_region
        _
      $region36: #{seg_loss.1} parent=27 // pred_fallthru
        _
    $region28: #{seg_loss.1} parent=5 // pred_fallthru
      _
    %p279 = scmp.le.s32.totalorder 2, %s8
    // Predicated region
    $region37: #{seg_loss.1} parent=5 // pred_check
      %p280 = pneg %p279
    $region38: #{seg_loss.1} parent=5 // pred_check_branch
      %282 = sbr.rel (%p280) target = $region40
    $region39: #{seg_loss.1} parent=5 // pred_region
      %s283 = ssub.s32 %s8, 2
      // Predicated region
      $region41: #{seg_loss.1} parent=39 // pred_check
        %p284 = pneg %p113
      $region42: #{seg_loss.1} parent=39 // pred_check_branch
        %286 = sbr.rel (%p284) target = $region44
      $region43: #{seg_loss.1} parent=39 // pred_region
        %p287 = scmp.lt.s32.totalorder %s19, 1
        %s288 = scalar_select %p287, %s19, 1
        %s289 = scalar_lea.vmem %s2, %s288
      $region44: #{seg_loss.1} parent=39 // pred_fallthru
        _
    $region40: #{seg_loss.1} parent=5 // pred_fallthru
      _
  $region6: #{seg_loss.1} parent=0 // loop_footer
    %s12 = sadd.s32 1, %s8
  $region7: #{seg_loss.1} parent=0 // loop_footer_branch
    %7 = sbr.rel target = $region3
  $region8: #{seg_loss.1} parent=0 // loop_exit
    _

</llo_original>
